<compile_context>
chip_gen: v5e
topology: v5e:2x2
jax: 0.10.0
libtpu: 0.0.40
codegen_flags: <defaults>
</compile_context>

<pallas_src>
import math
import jax
import jax.numpy as jnp
from jax.experimental import pallas as pl
from jax.experimental.pallas import tpu as pltpu


def _pad_amounts(kernel):
    """Replicates Pad_Conv2d.__init__ exactly."""
    kernel_x, kernel_y = kernel
    left = max(math.floor(kernel_y / 2) - 1, 0)
    right = max(math.floor(kernel_y / 2), 0)
    top = max(math.floor(kernel_x / 2) - 1, 0)
    bottom = max(math.floor(kernel_x / 2), 0)
    return left, right, top, bottom


def _sublane(dtype):
    """Sublane packing factor: 8 for 4-byte, 16 for 2-byte, 32 for 1-byte."""
    itemsize = jnp.dtype(dtype).itemsize
    return max(8, 32 // itemsize)


def _padded_plane_elems(h, w, dtype):
    """Elements one (h, w) plane occupies in VMEM after (sublane, 128) tiling."""
    s = _sublane(dtype)
    h_pad = -(-h // s) * s
    w_pad = -(-w // 128) * 128
    return h_pad * w_pad


def _budgets():
    """(double-buffered tile budget, vmem_limit cap) per TPU generation."""
    try:
        kind = jax.devices()[0].device_kind.lower()
    except Exception:  # pragma: no cover - defensive
        kind = ""
    if "v7" in kind or "7x" in kind:
        # v7x: only 64 MiB physical VMEM per TensorCore.
        return 32 * 1024 * 1024, 44 * 1024 * 1024
    # v5e / v6e: 128 MiB physical VMEM, single TensorCore.
    return 56 * 1024 * 1024, 96 * 1024 * 1024


def _pick_tiling(p_total, bytes_per_plane, budget_bytes):
    """Largest plane-tile whose double-buffered (in+out) footprint fits the
    budget; ragged blocking (no divisor requirement), >= 2 grid steps so both
    v7x TensorCores are used when there is enough work."""
    cap = max(1, budget_bytes // (2 * bytes_per_plane))
    tile_p = min(cap, p_total)
    num_steps = pl.cdiv(p_total, tile_p)
    if p_total >= 2:
        num_steps = max(num_steps, 2)
    # Rebalance so all blocks are (nearly) the same size.
    tile_p = pl.cdiv(p_total, num_steps)
    num_steps = pl.cdiv(p_total, tile_p)
    return int(tile_p), int(num_steps)


def pad_conv2d(x, kernel, value=0):
    """x: (N, C, H, W). Returns (N, C, H+top+bottom, W+left+right) padded with
    `value` (ConstantPad2d((left, right, top, bottom), value) semantics)."""
    left, right, top, bottom = _pad_amounts(kernel)
    N, C, H, W = x.shape
    H_out = H + top + bottom
    W_out = W + left + right
    dtype = x.dtype
    itemsize = jnp.dtype(dtype).itemsize

    p_total = N * C
    # Layout-padded bytes one plane really occupies in VMEM (input + output).
    bytes_per_plane = (
        _padded_plane_elems(H, W, dtype) + _padded_plane_elems(H_out, W_out, dtype)
    ) * itemsize

    budget_bytes, vmem_cap = _budgets()
    tile_p, num_steps = _pick_tiling(p_total, bytes_per_plane, budget_bytes)
    footprint = 2 * tile_p * bytes_per_plane  # double-buffered in + out
    vmem_limit = int(min(vmem_cap, max(footprint + (16 << 20), 32 << 20)))

    x_flat = x.reshape(p_total, H, W)
    # Runtime fill value lives in SMEM -> proper kernel input, not a traced
    # closure constant; changing `value` does not force a recompile.
    fill_arr = jnp.full((1,), value, dtype=dtype)

    def pad_kernel(value_ref, x_ref, o_ref):
        fill = value_ref[0]
        # Direct slab stores: four (tiny) constant border slabs + one interior
        # store.  No concatenate intermediate, no double write of the interior.
        if top:
            o_ref[:, :top, :] = jnp.full((tile_p, top, W_out), fill, dtype)
        if bottom:
            o_ref[:, top + H:, :] = jnp.full((tile_p, bottom, W_out), fill, dtype)
        if left:
            o_ref[:, top:top + H, :left] = jnp.full((tile_p, H, left), fill, dtype)
        if right:
            o_ref[:, top:top + H, left + W:] = jnp.full((tile_p, H, right), fill, dtype)
        o_ref[:, top:top + H, left:left + W] = x_ref[...]

    out_flat = pl.pallas_call(
        pad_kernel,
        out_shape=jax.ShapeDtypeStruct((p_total, H_out, W_out), dtype),
        grid=(num_steps,),
        in_specs=[
            pl.BlockSpec(memory_space=pltpu.MemorySpace.SMEM),      # fill value
            pl.BlockSpec((tile_p, H, W), lambda i: (i, 0, 0)),      # input planes
        ],
        out_specs=pl.BlockSpec((tile_p, H_out, W_out), lambda i: (i, 0, 0)),
        compiler_params=pltpu.CompilerParams(
            dimension_semantics=("parallel",),
            vmem_limit_bytes=vmem_limit,
        ),
    )(fill_arr, x_flat)

    return out_flat.reshape(N, C, H_out, W_out)


def _reference(x, kernel, value):
    left, right, top, bottom = _pad_amounts(kernel)
    return jnp.pad(
        x,
        ((0, 0), (0, 0), (top, bottom), (left, right)),
        mode="constant",
        constant_values=value,
    )


if __name__ == "__main__":
    key = jax.random.PRNGKey(0)

    # 1) Small NCHW input consistent with conv2d usage in the source repo.
    N, C, H, W = 2, 4, 16, 16
    x = jax.random.normal(key, (N, C, H, W), dtype=jnp.float32)

    # Pad_Conv2d((3, 5)) -> top=0, bottom=1, left=1, right=2 (asymmetric "same").
    out = jax.block_until_ready(pad_conv2d(x, (3, 5), value=0.0))
    ref = _reference(x, (3, 5), 0.0)
    assert out.shape == ref.shape, (out.shape, ref.shape)
    assert jnp.allclose(out, ref), "Pallas pad output mismatch vs reference (3,5)"

    # 2) Symmetric-ish kernel to cover the top==0 / left==0 paths, nonzero fill.
    out2 = jax.block_until_ready(pad_conv2d(x, (2, 2), value=1.5))
    ref2 = _reference(x, (2, 2), 1.5)
    assert out2.shape == ref2.shape and jnp.allclose(out2, ref2)

    # 3) Awkward plane count (N*C = 15, not divisible) to exercise ragged
    #    last-block handling, plus left==0 border path and negative fill.
    key2 = jax.random.PRNGKey(0)
    x3 = jax.random.normal(key2, (3, 5, 10, 20), dtype=jnp.float32)
    out3 = jax.block_until_ready(pad_conv2d(x3, (4, 3), value=-2.0))
    ref3 = _reference(x3, (4, 3), -2.0)
    assert out3.shape == ref3.shape and jnp.allclose(out3, ref3)

    print("KERNEL_OK")
</pallas_src>

<mosaic_0001>
module attributes {stable_mosaic.version = 11 : i64} {
  func.func @pad_kernel(%arg0: i32, %arg1: memref<1xf32, #tpu.memory_space<smem>>, %arg2: memref<4x16x16xf32, #tpu.memory_space<vmem>>, %arg3: memref<4x17x19xf32, #tpu.memory_space<vmem>>) attributes {dimension_semantics = [#tpu.dimension_semantics<parallel>], iteration_bounds = array<i64: 2>, scalar_prefetch = 0 : i64, scratch_operands = 0 : i64, tpu.core_type = #tpu.core_type<tc>, window_params = [{transform_indices = @transform_0, window_bounds = array<i64: 1>}, {transform_indices = @transform_1, window_bounds = array<i64: 4, 16, 16>}, {transform_indices = @transform_2, window_bounds = array<i64: 4, 17, 19>}]} {
    %c0 = arith.constant 0 : index
    %0 = memref.load %arg1[%c0] : memref<1xf32, #tpu.memory_space<smem>>
    %1 = vector.broadcast %0 : f32 to vector<4x1x19xf32>
    %c0_0 = arith.constant 0 : index
    %c16 = arith.constant 16 : index
    %c0_1 = arith.constant 0 : index
    %2 = vector.load %arg3[%c0_0, %c16, %c0_1] : memref<4x17x19xf32, #tpu.memory_space<vmem>>, vector<4x1x19xf32>
    tpu.vector_store %arg3[%c0_0, %c16, %c0_1], %1 {strides = array<i32>} : memref<4x17x19xf32, #tpu.memory_space<vmem>>, vector<4x1x19xf32>,
    %3 = vector.broadcast %0 : f32 to vector<4x16x1xf32>
    %c0_2 = arith.constant 0 : index
    %c0_3 = arith.constant 0 : index
    %c0_4 = arith.constant 0 : index
    %4 = vector.load %arg3[%c0_2, %c0_3, %c0_4] : memref<4x17x19xf32, #tpu.memory_space<vmem>>, vector<4x16x1xf32>
    tpu.vector_store %arg3[%c0_2, %c0_3, %c0_4], %3 {strides = array<i32>} : memref<4x17x19xf32, #tpu.memory_space<vmem>>, vector<4x16x1xf32>,
    %5 = vector.broadcast %0 : f32 to vector<4x16x2xf32>
    %c0_5 = arith.constant 0 : index
    %c0_6 = arith.constant 0 : index
    %c17 = arith.constant 17 : index
    %6 = vector.load %arg3[%c0_5, %c0_6, %c17] : memref<4x17x19xf32, #tpu.memory_space<vmem>>, vector<4x16x2xf32>
    tpu.vector_store %arg3[%c0_5, %c0_6, %c17], %5 {strides = array<i32>} : memref<4x17x19xf32, #tpu.memory_space<vmem>>, vector<4x16x2xf32>,
    %c0_7 = arith.constant 0 : index
    %c0_8 = arith.constant 0 : index
    %c0_9 = arith.constant 0 : index
    %7 = vector.load %arg2[%c0_7, %c0_8, %c0_9] : memref<4x16x16xf32, #tpu.memory_space<vmem>>, vector<4x16x16xf32>
    %c0_10 = arith.constant 0 : index
    %c0_11 = arith.constant 0 : index
    %c1 = arith.constant 1 : index
    %8 = vector.load %arg3[%c0_10, %c0_11, %c1] : memref<4x17x19xf32, #tpu.memory_space<vmem>>, vector<4x16x16xf32>
    tpu.vector_store %arg3[%c0_10, %c0_11, %c1], %7 {strides = array<i32>} : memref<4x17x19xf32, #tpu.memory_space<vmem>>, vector<4x16x16xf32>,
    return
  }
  func.func @transform_0(%arg0: i32) -> i32 {
    %c0_i32 = arith.constant 0 : i32
    %c0_i32_0 = arith.constant 0 : i32
    return %c0_i32 : i32
  }
  func.func @transform_1(%arg0: i32) -> (i32, i32, i32) {
    %c0_i32 = arith.constant 0 : i32
    %c0_i32_0 = arith.constant 0 : i32
    %c0_i32_1 = arith.constant 0 : i32
    return %arg0, %c0_i32, %c0_i32_0 : i32, i32, i32
  }
  func.func @transform_2(%arg0: i32) -> (i32, i32, i32) {
    %c0_i32 = arith.constant 0 : i32
    %c0_i32_0 = arith.constant 0 : i32
    %c0_i32_1 = arith.constant 0 : i32
    return %arg0, %c0_i32, %c0_i32_0 : i32, i32, i32
  }
}

</mosaic_0001>

<llo_original>
// kernel: tpu_custom_call.1
$region0: #{tpu_custom_call.1}
  #allocation0 [shape = 'u32[]', space=smem, size = 0x4, offset = 0x4, fixed_abs, tag = 'smem constant byte address 0x4 - core index']
  #allocation1 [shape = 'u32[72,128]{1,0:T(1,128)}', space=vmem, size = 0x9000, scoped, tag = 'internal scratch']
  #allocation2 [shape = 'f32[1]{0:T(128)S(6)}', space=smem, size = 0x200, scoped, tag = 'scoped memory for tpu_custom_call.1']
  %s0 = inlined_call_operand.<no memory space> [shape: f32[1], index: 0, kind: input, shape index: {}]
  %s1 = inlined_call_operand.hbm [shape: f32[8,16,16], index: 1, kind: input, shape index: {}]
  %s2 = inlined_call_operand.vmem [shape: f32[8,17,19], index: 2, kind: output, shape index: {}]
  %s3 = sld [smem:[#allocation0]]
  $region45: #{tpu_custom_call.1} parent=0
    _
  %s5 = ssub.s32 1, %s3
  %s6 = scalar_select 0, %s5, %s3
  %7 = sst [smem:[#allocation2]] %s0
  $region1: #{tpu_custom_call.1} parent=0
    #allocation3 [shape = 'u8[65536]{0}', space=vmem, size = 0x10000, scoped, tag = 'input window, operand 1']
    #allocation4 [shape = 's32[2]{0}', space=sflag, size = 0x8, scoped, tag = 'scoped memory for tpu_custom_call.1']
    %8 = vsyncpa [#allocation4], 0
    %s9 = scalar_lea.sflag [#allocation4], 1
    %10 = vsyncpa %s9, 0
    loop: start=0, step=1, limit=4
    $region2: #{tpu_custom_call.1} parent=1 // loop_pre_header
      _
    $region3: #{tpu_custom_call.1} parent=1 // loop_header
      %s12 = sphi 0, %s16
      %p13 = scmp.ge.s32.totalorder %s12, 4
      %s20 = sphi 0, %s20
      %s22 = sphi 0, %s20
      %s23 = sphi 0, %s22
      %s37 = sphi 0, %s23
      %s43 = sphi 0, %s45
      %s46 = sphi 0, %s43
      %s47 = sphi 0, %s46
      %s63 = sphi 0, %s47
      %s69 = sphi 0, %s71
      %s72 = sphi 0, %s69
      %s73 = sphi 0, %s72
      %s89 = sphi 0, %s73
    $region4: #{tpu_custom_call.1} parent=1 // loop_header_branch
      %15 = sbr.rel (%p13) target = $region8
    $region5: #{tpu_custom_call.1} parent=1 // loop_body
      %s17 = ssub.s32 %s12, 1
      %s18 = ssub.s32 %s12, 2
      %s19 = sadd.s32 %s12, 1
      %s21 = sadd.s32 %s20, 1
      %p24 = scmp.eq.s32.totalorder %s12, 1
      %p25 = scmp.ne.s32.totalorder %s20, %s22
      %p26 = scmp.eq.s32.totalorder %s12, 0
      %p27 = por %p25, %p26
      %p28 = scmp.ne.s32.totalorder %s20, %s22
      %p29 = scmp.eq.s32.totalorder %s17, 1
      %p30 = por %p28, %p29
      %p31 = scmp.ne.s32.totalorder %s22, %s23
      %p32 = scmp.eq.s32.totalorder %s17, 0
      %p33 = por %p31, %p32
      %p34 = scmp.ne.s32.totalorder %s22, %s23
      %p35 = scmp.eq.s32.totalorder %s18, 1
      %p36 = por %p34, %p35
      %p38 = scmp.ne.s32.totalorder %s23, %s37
      %p39 = scmp.eq.s32.totalorder %s18, 0
      %p40 = por %p38, %p39
      %s41 = ssub.s32 %s12, %s19
      %p42 = scmp.eq.s32.totalorder %s41, 0
      %s44 = sadd.s32 %s43, 1
      %s45 = scalar_select %p42, %s43, %s44
      %p48 = pneg %p42
      %p49 = scmp.eq.s32.totalorder %s12, 1
      %p50 = por %p48, %p49
      %p51 = scmp.ne.s32.totalorder %s43, %s46
      %p52 = scmp.eq.s32.totalorder %s12, 0
      %p53 = por %p51, %p52
      %p54 = scmp.ne.s32.totalorder %s43, %s46
      %p55 = scmp.eq.s32.totalorder %s17, 1
      %p56 = por %p54, %p55
      %p57 = scmp.ne.s32.totalorder %s46, %s47
      %p58 = scmp.eq.s32.totalorder %s17, 0
      %p59 = por %p57, %p58
      %p60 = scmp.ne.s32.totalorder %s46, %s47
      %p61 = scmp.eq.s32.totalorder %s18, 1
      %p62 = por %p60, %p61
      %p64 = scmp.ne.s32.totalorder %s47, %s63
      %p65 = scmp.eq.s32.totalorder %s18, 0
      %p66 = por %p64, %p65
      %s67 = ssub.s32 %s12, %s19
      %p68 = scmp.eq.s32.totalorder %s67, 0
      %s70 = sadd.s32 %s69, 1
      %s71 = scalar_select %p68, %s69, %s70
      %p74 = pneg %p68
      %p75 = scmp.eq.s32.totalorder %s12, 1
      %p76 = por %p74, %p75
      %p77 = scmp.ne.s32.totalorder %s69, %s72
      %p78 = scmp.eq.s32.totalorder %s12, 0
      %p79 = por %p77, %p78
      %p80 = scmp.ne.s32.totalorder %s69, %s72
      %p81 = scmp.eq.s32.totalorder %s17, 1
      %p82 = por %p80, %p81
      %p83 = scmp.ne.s32.totalorder %s72, %s73
      %p84 = scmp.eq.s32.totalorder %s17, 0
      %p85 = por %p83, %p84
      %p86 = scmp.ne.s32.totalorder %s72, %s73
      %p87 = scmp.eq.s32.totalorder %s18, 1
      %p88 = por %p86, %p87
      %p90 = scmp.ne.s32.totalorder %s73, %s89
      %p91 = scmp.eq.s32.totalorder %s18, 0
      %p92 = por %p90, %p91
      %p93 = scmp.le.s32.totalorder 1, %s12
      %p94 = scmp.lt.s32.totalorder %s12, 3
      %p95 = pnand %p93, %p94
      %p96 = pneg %p95
      // Predicated region
      $region9: #{tpu_custom_call.1} parent=5 // pred_check
        _
      $region10: #{tpu_custom_call.1} parent=5 // pred_check_branch
        %98 = sbr.rel (%p95) target = $region12
      $region11: #{tpu_custom_call.1} parent=5 // pred_region
        %s99 = ssub.s32 %s12, 1
        // Predicated region
        $region13: #{tpu_custom_call.1} parent=11 // pred_check
          %p100 = pneg %p33
        $region14: #{tpu_custom_call.1} parent=11 // pred_check_branch
          %102 = sbr.rel (%p100) target = $region16
        $region15: #{tpu_custom_call.1} parent=11 // pred_region
          _
        $region16: #{tpu_custom_call.1} parent=11 // pred_fallthru
          _
      $region12: #{tpu_custom_call.1} parent=5 // pred_fallthru
        _
      %p103 = scmp.lt.s32.totalorder %s12, 2
      // Predicated region
      $region17: #{tpu_custom_call.1} parent=5 // pred_check
        %p104 = pneg %p103
      $region18: #{tpu_custom_call.1} parent=5 // pred_check_branch
        %106 = sbr.rel (%p104) target = $region20
      $region19: #{tpu_custom_call.1} parent=5 // pred_region
        // Predicated region
        $region21: #{tpu_custom_call.1} parent=19 // pred_check
          %p107 = pneg %p53
        $region22: #{tpu_custom_call.1} parent=19 // pred_check_branch
          %109 = sbr.rel (%p107) target = $region24
        $region23: #{tpu_custom_call.1} parent=19 // pred_region
          %s110 = sand.u32 %s43, 1
          %s111 = scalar_lea.sflag [#allocation4], %s110
          %s112 = sand.u32 %s43, 1
          %s113 = smul.addr %s112, 64
          %s114 = scalar_lea.vmem [#allocation3], %s113
          %s115 = smul.u32 4, %s12
          %117 = vsyncadd %s111, 0
          %s118 = smul.addr %s115, 2
          %s119 = smul.addr %s118, 8
          %s120 = scalar_lea.hbm %s1, %s119
          %s121 = sshll.u32 %s120, 4
          %s122 = int_to_ptr.hbm [resolvable:$true] %s121
          %s123 = sshll.u32 %s114, 4
          %s124 = int_to_ptr.vmem [resolvable:$true] %s123
          %129 = dma.hbm_to_vmem [thread:$0]  %s122, 1024, %s124, %s111, 128, 128, 8
        $region24: #{tpu_custom_call.1} parent=19 // pred_fallthru
          _
      $region20: #{tpu_custom_call.1} parent=5 // pred_fallthru
        _
      %p130 = scmp.le.s32.totalorder 1, %s12
      %p131 = scmp.lt.s32.totalorder %s12, 3
      %p132 = pnand %p130, %p131
      %p133 = pneg %p132
      // Predicated region
      $region25: #{tpu_custom_call.1} parent=5 // pred_check
        _
      $region26: #{tpu_custom_call.1} parent=5 // pred_check_branch
        %135 = sbr.rel (%p132) target = $region28
      $region27: #{tpu_custom_call.1} parent=5 // pred_region
        %s136 = ssub.s32 %s12, 1
        %s137 = sand.u32 %s46, 1
        %s138 = scalar_lea.sflag [#allocation4], %s137
        %s139 = sand.u32 %s46, 1
        %s140 = smul.addr %s139, 64
        %s141 = scalar_lea.vmem [#allocation3], %s140
        // Predicated region
        $region29: #{tpu_custom_call.1} parent=27 // pred_check
          %p142 = pneg %p59
        $region30: #{tpu_custom_call.1} parent=27 // pred_check_branch
          %144 = sbr.rel (%p142) target = $region32
        $region31: #{tpu_custom_call.1} parent=27 // pred_region
          %146 = dma.done %s138, 1024
        $region32: #{tpu_custom_call.1} parent=27 // pred_fallthru
          _
        %p147 = pneg %p33
        %p148 = pneg %p30
        %s149 = sand.u32 %s46, 1
        %s150 = scalar_lea.sflag [#allocation4], %s149
        %s151 = sand.u32 %s46, 1
        %s152 = smul.addr %s151, 64
        %s153 = scalar_lea.vmem [#allocation3], %s152
        %p154 = pneg %p59
        %p155 = pneg %p56
        %p156 = pneg %p85
        %p157 = pneg %p82
        %s158 = smul.u32 4, %s17
        %p159 = scmp.lt.s32.totalorder %s158, 7
        %s160 = scalar_select %p159, %s158, 7
        %s161 = smul.addr %s160, 3
        %s162 = smul.addr %s161, 8
        %s163 = scalar_lea.vmem %s2, %s162
        %s164 = smul.u32 4, %s17
        %s165 = smul.u32 4, %s17
        %p166 = scmp.lt.s32.totalorder %s165, 7
        %s167 = scalar_select %p166, %s165, 7
        %s168 = smul.addr %s167, 3
        %s169 = smul.addr %s168, 8
        %s170 = scalar_lea.vmem %s2, %s169
        %s171 = smul.u32 4, %s17
        %s172 = sld [smem:[#allocation2]]
        %v173 = vstv %s172
        %vm174 = vcmask 147456
        %175 = vst.msk [vmem:[%s170 + $0x10] sm:$0x1] %vm174, %v173
        %176 = vst.msk [vmem:[%s170 + $0x28] sm:$0x1] %vm174, %v173
        %177 = vst.msk [vmem:[%s170 + $0x40] sm:$0x1] %vm174, %v173
        %178 = vst.msk [vmem:[%s170 + $0x58] sm:$0x1] %vm174, %v173
        %vm179 = vcmask 7168
        %180 = vst.msk [vmem:[%s170] sm:$0xff] %vm179, %v173
        %181 = vst.msk [vmem:[%s170 + $0x8] sm:$0xff] %vm179, %v173
        %182 = vst.msk [vmem:[%s170 + $0x18] sm:$0xff] %vm179, %v173
        %183 = vst.msk [vmem:[%s170 + $0x20] sm:$0xff] %vm179, %v173
        %184 = vst.msk [vmem:[%s170 + $0x30] sm:$0xff] %vm179, %v173
        %185 = vst.msk [vmem:[%s170 + $0x38] sm:$0xff] %vm179, %v173
        %186 = vst.msk [vmem:[%s170 + $0x48] sm:$0xff] %vm179, %v173
        %187 = vst.msk [vmem:[%s170 + $0x50] sm:$0xff] %vm179, %v173
        %vm188 = vcmask 154760
        %189 = vst.msk [vmem:[%s170] sm:$0xff] %vm188, %v173
        %190 = vst.msk [vmem:[%s170 + $0x8] sm:$0xff] %vm188, %v173
        %191 = vst.msk [vmem:[%s170 + $0x18] sm:$0xff] %vm188, %v173
        %192 = vst.msk [vmem:[%s170 + $0x20] sm:$0xff] %vm188, %v173
        %193 = vst.msk [vmem:[%s170 + $0x30] sm:$0xff] %vm188, %v173
        %194 = vst.msk [vmem:[%s170 + $0x38] sm:$0xff] %vm188, %v173
        %195 = vst.msk [vmem:[%s170 + $0x48] sm:$0xff] %vm188, %v173
        %196 = vst.msk [vmem:[%s170 + $0x50] sm:$0xff] %vm188, %v173
        %v197 = vld [vmem:[%s141] sm:$0xff]
        %v198 = vld [vmem:[%s141 + $0x8] sm:$0xff]
        %v199 = vld [vmem:[%s141 + $0x10] sm:$0xff]
        %v200 = vld [vmem:[%s141 + $0x18] sm:$0xff]
        %v201 = vld [vmem:[%s141 + $0x20] sm:$0xff]
        %v202 = vld [vmem:[%s141 + $0x28] sm:$0xff]
        %v203 = vld [vmem:[%s141 + $0x30] sm:$0xff]
        %v204 = vld [vmem:[%s141 + $0x38] sm:$0xff]
        %213 = vrot.lane.b32.xlu0 %v197, 1
        %v214 = vpop.permute.xlu0 %213
        %215 = vrot.lane.b32.xlu0 %v198, 1
        %v216 = vpop.permute.xlu0 %215
        %217 = vrot.lane.b32.xlu0 %v199, 1
        %v218 = vpop.permute.xlu0 %217
        %219 = vrot.lane.b32.xlu0 %v200, 1
        %v220 = vpop.permute.xlu0 %219
        %221 = vrot.lane.b32.xlu0 %v201, 1
        %v222 = vpop.permute.xlu0 %221
        %223 = vrot.lane.b32.xlu0 %v202, 1
        %v224 = vpop.permute.xlu0 %223
        %225 = vrot.lane.b32.xlu0 %v203, 1
        %v226 = vpop.permute.xlu0 %225
        %227 = vrot.lane.b32.xlu0 %v204, 1
        %v228 = vpop.permute.xlu0 %227
        %vm237 = vcmask 138248
        %238 = vst.msk [vmem:[%s170] sm:$0xff] %vm237, %v214
        %239 = vst.msk [vmem:[%s170 + $0x8] sm:$0xff] %vm237, %v216
        %240 = vst.msk [vmem:[%s170 + $0x18] sm:$0xff] %vm237, %v218
        %241 = vst.msk [vmem:[%s170 + $0x20] sm:$0xff] %vm237, %v220
        %242 = vst.msk [vmem:[%s170 + $0x30] sm:$0xff] %vm237, %v222
        %243 = vst.msk [vmem:[%s170 + $0x38] sm:$0xff] %vm237, %v224
        %244 = vst.msk [vmem:[%s170 + $0x48] sm:$0xff] %vm237, %v226
        %245 = vst.msk [vmem:[%s170 + $0x50] sm:$0xff] %vm237, %v228
        %s246 = smul.u32 4, %s17
        %p247 = scmp.lt.s32.totalorder %s246, 7
        %s248 = scalar_select %p247, %s246, 7
        %s249 = smul.addr %s248, 3
        %s250 = smul.addr %s249, 8
        %s251 = scalar_lea.vmem %s2, %s250
        // Predicated region
        $region33: #{tpu_custom_call.1} parent=27 // pred_check
          %p252 = pneg %p82
        $region34: #{tpu_custom_call.1} parent=27 // pred_check_branch
          %254 = sbr.rel (%p252) target = $region36
        $region35: #{tpu_custom_call.1} parent=27 // pred_region
          %s255 = smul.u32 4, %s17
        $region36: #{tpu_custom_call.1} parent=27 // pred_fallthru
          _
      $region28: #{tpu_custom_call.1} parent=5 // pred_fallthru
        _
      %p256 = scmp.le.s32.totalorder 2, %s12
      // Predicated region
      $region37: #{tpu_custom_call.1} parent=5 // pred_check
        %p257 = pneg %p256
      $region38: #{tpu_custom_call.1} parent=5 // pred_check_branch
        %259 = sbr.rel (%p257) target = $region40
      $region39: #{tpu_custom_call.1} parent=5 // pred_region
        %s260 = ssub.s32 %s12, 2
        // Predicated region
        $region41: #{tpu_custom_call.1} parent=39 // pred_check
          %p261 = pneg %p88
        $region42: #{tpu_custom_call.1} parent=39 // pred_check_branch
          %263 = sbr.rel (%p261) target = $region44
        $region43: #{tpu_custom_call.1} parent=39 // pred_region
          %s264 = smul.u32 4, %s18
          %p265 = scmp.lt.s32.totalorder %s264, 7
          %s266 = scalar_select %p265, %s264, 7
          %s267 = smul.addr %s266, 3
          %s268 = smul.addr %s267, 8
          %s269 = scalar_lea.vmem %s2, %s268
        $region44: #{tpu_custom_call.1} parent=39 // pred_fallthru
          _
      $region40: #{tpu_custom_call.1} parent=5 // pred_fallthru
        _
    $region6: #{tpu_custom_call.1} parent=1 // loop_footer
      %s16 = sadd.s32 1, %s12
    $region7: #{tpu_custom_call.1} parent=1 // loop_footer_branch
      %11 = sbr.rel target = $region3
    $region8: #{tpu_custom_call.1} parent=1 // loop_exit
      _
    %270 = vsyncpa [#allocation4], 1
    %s271 = scalar_lea.sflag [#allocation4], 1
    %272 = vsyncpa %s271, 1

</llo_original>
